<compile_context>
chip_gen: v5e
topology: v5e:2x2
jax: 0.10.0
libtpu: 0.0.40
codegen_flags: <defaults>
</compile_context>

<pallas_src>
import math
import functools

import jax
import jax.numpy as jnp
from jax.experimental import pallas as pl
from jax.experimental.pallas import tpu as pltpu


def _get_pad(size: int, multiple: int):
    new_size = math.ceil(size / multiple) * multiple
    pad = new_size - size
    left = pad // 2
    right = pad - left
    return left, right


def _center_pad_kernel(x_ref, o_ref, *, pad_top, pad_bot, pad_left, pad_right):
    # x_ref: (Cb, H, W), o_ref: (Cb, H_out, W_out) — a block of Cb fused (n, c)
    # slices. Interior is written once; only the border strips are zero-filled.
    cb, h, w = x_ref.shape
    _, _, w_out = o_ref.shape
    dt = o_ref.dtype

    if pad_top > 0:
        o_ref[:, :pad_top, :] = jnp.zeros((cb, pad_top, w_out), dt)
    if pad_bot > 0:
        o_ref[:, pad_top + h:, :] = jnp.zeros((cb, pad_bot, w_out), dt)
    if pad_left > 0:
        o_ref[:, pad_top:pad_top + h, :pad_left] = jnp.zeros((cb, h, pad_left), dt)
    if pad_right > 0:
        o_ref[:, pad_top:pad_top + h, pad_left + w:] = jnp.zeros((cb, h, pad_right), dt)
    o_ref[:, pad_top:pad_top + h, pad_left:pad_left + w] = x_ref[...]


# Budget for one grid step's working set assuming double-buffered in+out
# blocks. Chosen conservatively so it fits every chip's scoped-VMEM default
# (v5e 16 MiB) and leaves ample headroom on v7x (64 MiB physical per TC).
_VMEM_BLOCK_BUDGET_BYTES = 8 * 1024 * 1024


def center_padding(x: jax.Array, multiple: int = 14) -> jax.Array:
    """Pallas equivalent of CenterPadding(multiple).forward(x) for NCHW input."""
    N, C, H, W = x.shape
    pad_top, pad_bot = _get_pad(H, multiple)
    pad_lft, pad_rgt = _get_pad(W, multiple)
    if (pad_top, pad_bot, pad_lft, pad_rgt) == (0, 0, 0, 0):
        return x

    H_out = H + pad_top + pad_bot
    W_out = W + pad_lft + pad_rgt
    NC = N * C

    # Flatten (N, C) -> one axis; channels are contiguous in NCHW so a block of
    # Cb channels (full spatial extent) is one contiguous HBM region.
    x_flat = x.reshape(NC, H, W)

    itemsize = jnp.dtype(x.dtype).itemsize
    per_chan_bytes = (H * W + H_out * W_out) * itemsize
    cb = max(1, min(NC, _VMEM_BLOCK_BUDGET_BYTES // (2 * per_chan_bytes)))
    grid = (pl.cdiv(NC, cb),)
    # Ragged last block (NC % cb != 0) is safe: each output channel-row depends
    # only on its own input channel-row, and out-of-bounds output rows are not
    # written back by Pallas.

    kernel = functools.partial(
        _center_pad_kernel,
        pad_top=pad_top, pad_bot=pad_bot, pad_left=pad_lft, pad_right=pad_rgt,
    )

    out_flat = pl.pallas_call(
        kernel,
        out_shape=jax.ShapeDtypeStruct((NC, H_out, W_out), x.dtype),
        grid=grid,
        # Spatial block dims equal the full array extents, so the (8,128)
        # tiling constraint does not apply; Cb channels ride the leading dim.
        in_specs=[pl.BlockSpec((cb, H, W), lambda i: (i, 0, 0))],
        out_specs=pl.BlockSpec((cb, H_out, W_out), lambda i: (i, 0, 0)),
        compiler_params=pltpu.CompilerParams(
            dimension_semantics=("parallel",),
            vmem_limit_bytes=32 * 1024 * 1024,
        ),
        cost_estimate=pl.CostEstimate(
            flops=0,
            transcendentals=0,
            bytes_accessed=NC * (H * W + H_out * W_out) * itemsize,
        ),
    )(x_flat)

    return out_flat.reshape(N, C, H_out, W_out)


def _reference(x: jax.Array, multiple: int = 14) -> jax.Array:
    # Pure-JAX reference mirroring the PyTorch semantics.
    _, _, H, W = x.shape
    pt, pb = _get_pad(H, multiple)
    pl_, pr = _get_pad(W, multiple)
    return jnp.pad(x, ((0, 0), (0, 0), (pt, pb), (pl_, pr)))


if __name__ == "__main__":
    key = jax.random.PRNGKey(0)
    # Small NCHW input consistent with the module's forward (conv-style input).
    x = jax.random.normal(key, (2, 4, 16, 16), dtype=jnp.float32)

    out = jax.block_until_ready(center_padding(x, multiple=14))

    ref = _reference(x, multiple=14)
    assert out.shape == ref.shape == (2, 4, 28, 28), out.shape
    assert out.dtype == x.dtype
    assert jnp.array_equal(out, ref), "mismatch vs reference"

    print("KERNEL_OK")
</pallas_src>

<mosaic_0001>
module attributes {stable_mosaic.version = 11 : i64} {
  func.func @_center_pad_kernel(%arg0: i32, %arg1: memref<8x16x16xf32, #tpu.memory_space<vmem>>, %arg2: memref<8x28x28xf32, #tpu.memory_space<vmem>>) attributes {dimension_semantics = [#tpu.dimension_semantics<parallel>], iteration_bounds = array<i64: 1>, scalar_prefetch = 0 : i64, scratch_operands = 0 : i64, tpu.core_type = #tpu.core_type<tc>, window_params = [{transform_indices = @transform_0, window_bounds = array<i64: 8, 16, 16>}, {transform_indices = @transform_1, window_bounds = array<i64: 8, 28, 28>}]} {
    %cst = arith.constant 0.000000e+00 : f32
    %0 = vector.broadcast %cst : f32 to vector<8x6x28xf32>
    %c0 = arith.constant 0 : index
    %c0_0 = arith.constant 0 : index
    %c0_1 = arith.constant 0 : index
    %1 = vector.load %arg2[%c0, %c0_0, %c0_1] : memref<8x28x28xf32, #tpu.memory_space<vmem>>, vector<8x6x28xf32>
    tpu.vector_store %arg2[%c0, %c0_0, %c0_1], %0 {strides = array<i32>} : memref<8x28x28xf32, #tpu.memory_space<vmem>>, vector<8x6x28xf32>,
    %cst_2 = arith.constant 0.000000e+00 : f32
    %2 = vector.broadcast %cst_2 : f32 to vector<8x6x28xf32>
    %c0_3 = arith.constant 0 : index
    %c22 = arith.constant 22 : index
    %c0_4 = arith.constant 0 : index
    %3 = vector.load %arg2[%c0_3, %c22, %c0_4] : memref<8x28x28xf32, #tpu.memory_space<vmem>>, vector<8x6x28xf32>
    tpu.vector_store %arg2[%c0_3, %c22, %c0_4], %2 {strides = array<i32>} : memref<8x28x28xf32, #tpu.memory_space<vmem>>, vector<8x6x28xf32>,
    %cst_5 = arith.constant 0.000000e+00 : f32
    %4 = vector.broadcast %cst_5 : f32 to vector<8x16x6xf32>
    %c0_6 = arith.constant 0 : index
    %c6 = arith.constant 6 : index
    %c0_7 = arith.constant 0 : index
    %5 = vector.load %arg2[%c0_6, %c6, %c0_7] : memref<8x28x28xf32, #tpu.memory_space<vmem>>, vector<8x16x6xf32>
    tpu.vector_store %arg2[%c0_6, %c6, %c0_7], %4 {strides = array<i32>} : memref<8x28x28xf32, #tpu.memory_space<vmem>>, vector<8x16x6xf32>,
    %cst_8 = arith.constant 0.000000e+00 : f32
    %6 = vector.broadcast %cst_8 : f32 to vector<8x16x6xf32>
    %c0_9 = arith.constant 0 : index
    %c6_10 = arith.constant 6 : index
    %c22_11 = arith.constant 22 : index
    %7 = vector.load %arg2[%c0_9, %c6_10, %c22_11] : memref<8x28x28xf32, #tpu.memory_space<vmem>>, vector<8x16x6xf32>
    tpu.vector_store %arg2[%c0_9, %c6_10, %c22_11], %6 {strides = array<i32>} : memref<8x28x28xf32, #tpu.memory_space<vmem>>, vector<8x16x6xf32>,
    %c0_12 = arith.constant 0 : index
    %c0_13 = arith.constant 0 : index
    %c0_14 = arith.constant 0 : index
    %8 = vector.load %arg1[%c0_12, %c0_13, %c0_14] : memref<8x16x16xf32, #tpu.memory_space<vmem>>, vector<8x16x16xf32>
    %c0_15 = arith.constant 0 : index
    %c6_16 = arith.constant 6 : index
    %c6_17 = arith.constant 6 : index
    %9 = vector.load %arg2[%c0_15, %c6_16, %c6_17] : memref<8x28x28xf32, #tpu.memory_space<vmem>>, vector<8x16x16xf32>
    tpu.vector_store %arg2[%c0_15, %c6_16, %c6_17], %8 {strides = array<i32>} : memref<8x28x28xf32, #tpu.memory_space<vmem>>, vector<8x16x16xf32>,
    return
  }
  func.func @transform_0(%arg0: i32) -> (i32, i32, i32) {
    %c0_i32 = arith.constant 0 : i32
    %c0_i32_0 = arith.constant 0 : i32
    %c0_i32_1 = arith.constant 0 : i32
    return %arg0, %c0_i32, %c0_i32_0 : i32, i32, i32
  }
  func.func @transform_1(%arg0: i32) -> (i32, i32, i32) {
    %c0_i32 = arith.constant 0 : i32
    %c0_i32_0 = arith.constant 0 : i32
    %c0_i32_1 = arith.constant 0 : i32
    return %arg0, %c0_i32, %c0_i32_0 : i32, i32, i32
  }
}

</mosaic_0001>

<llo_original>
// kernel: tpu_custom_call.1
$region0: #{tpu_custom_call.1}
  #allocation0 [shape = 'u32[]', space=smem, size = 0x4, offset = 0x4, fixed_abs, tag = 'smem constant byte address 0x4 - core index']
  #allocation1 [shape = 'u32[72,128]{1,0:T(1,128)}', space=vmem, size = 0x9000, scoped, tag = 'internal scratch']
  %s0 = inlined_call_operand.hbm [shape: f32[8,16,16], index: 0, kind: input, shape index: {}]
  %s1 = inlined_call_operand.vmem [shape: f32[8,28,28], index: 1, kind: output, shape index: {}]
  %s2 = sld [smem:[#allocation0]]
  $region18: #{tpu_custom_call.1} parent=0
    _
  %s4 = ssub.s32 1, %s2
  %s5 = scalar_select 0, %s4, %s2
  $region1: #{tpu_custom_call.1} parent=0
    #allocation2 [shape = 'u8[65536]{0}', space=vmem, size = 0x10000, scoped, tag = 'input window, operand 0, single buffered']
    #allocation3 [shape = 's32[1]{0}', space=sflag, size = 0x4, scoped, tag = 'scoped memory for tpu_custom_call.1']
    %6 = vsyncpa [#allocation3], 0
    // Predicated region
    $region2: #{tpu_custom_call.1} parent=1 // pred_check
      _
    $region3: #{tpu_custom_call.1} parent=1 // pred_check_branch
      %8 = sbr.rel (0) target = $region5
    $region4: #{tpu_custom_call.1} parent=1 // pred_region
      %10 = vsyncadd [#allocation3], 0
      %s11 = sshll.u32 %s0, 4
      %s12 = int_to_ptr.hbm [resolvable:$true] %s11
      %s13 = sshll.u32 [#allocation2], 4
      %s14 = int_to_ptr.vmem [resolvable:$true] %s13
      %19 = dma.hbm_to_vmem [thread:$0]  %s12, 2048, %s14, [#allocation3], 128, 128, 8
    $region5: #{tpu_custom_call.1} parent=1 // pred_fallthru
      _
    // Predicated region
    $region6: #{tpu_custom_call.1} parent=1 // pred_check
      _
    $region7: #{tpu_custom_call.1} parent=1 // pred_check_branch
      %21 = sbr.rel (0) target = $region9
    $region8: #{tpu_custom_call.1} parent=1 // pred_region
      %23 = dma.done [#allocation3], 2048
    $region9: #{tpu_custom_call.1} parent=1 // pred_fallthru
      _
    %vm24 = vcmask 226304
    %25 = vst.msk [vmem:[%s1] sm:$0x3f] %vm24, 0.0
    %26 = vst.msk [vmem:[%s1 + $0x20] sm:$0x3f] %vm24, 0.0
    %27 = vst.msk [vmem:[%s1 + $0x40] sm:$0x3f] %vm24, 0.0
    %28 = vst.msk [vmem:[%s1 + $0x60] sm:$0x3f] %vm24, 0.0
    %29 = vst.msk [vmem:[%s1 + $0x80] sm:$0x3f] %vm24, 0.0
    %30 = vst.msk [vmem:[%s1 + $0xa0] sm:$0x3f] %vm24, 0.0
    %31 = vst.msk [vmem:[%s1 + $0xc0] sm:$0x3f] %vm24, 0.0
    %32 = vst.msk [vmem:[%s1 + $0xe0] sm:$0x3f] %vm24, 0.0
    %33 = vst.msk [vmem:[%s1 + $0x16] sm:$0x3f] %vm24, 0.0
    %34 = vst.msk [vmem:[%s1 + $0x36] sm:$0x3f] %vm24, 0.0
    %35 = vst.msk [vmem:[%s1 + $0x56] sm:$0x3f] %vm24, 0.0
    %36 = vst.msk [vmem:[%s1 + $0x76] sm:$0x3f] %vm24, 0.0
    %37 = vst.msk [vmem:[%s1 + $0x96] sm:$0x3f] %vm24, 0.0
    %38 = vst.msk [vmem:[%s1 + $0xb6] sm:$0x3f] %vm24, 0.0
    %39 = vst.msk [vmem:[%s1 + $0xd6] sm:$0x3f] %vm24, 0.0
    %40 = vst.msk [vmem:[%s1 + $0xf6] sm:$0x3f] %vm24, 0.0
    %vm41 = vcmask 48128
    %42 = vst.msk [vmem:[%s1 + $0x6] sm:$0xff] %vm41, 0.0
    %43 = vst.msk [vmem:[%s1 + $0xe] sm:$0xff] %vm41, 0.0
    %44 = vst.msk [vmem:[%s1 + $0x26] sm:$0xff] %vm41, 0.0
    %45 = vst.msk [vmem:[%s1 + $0x2e] sm:$0xff] %vm41, 0.0
    %46 = vst.msk [vmem:[%s1 + $0x46] sm:$0xff] %vm41, 0.0
    %47 = vst.msk [vmem:[%s1 + $0x4e] sm:$0xff] %vm41, 0.0
    %48 = vst.msk [vmem:[%s1 + $0x66] sm:$0xff] %vm41, 0.0
    %49 = vst.msk [vmem:[%s1 + $0x6e] sm:$0xff] %vm41, 0.0
    %50 = vst.msk [vmem:[%s1 + $0x86] sm:$0xff] %vm41, 0.0
    %51 = vst.msk [vmem:[%s1 + $0x8e] sm:$0xff] %vm41, 0.0
    %52 = vst.msk [vmem:[%s1 + $0xa6] sm:$0xff] %vm41, 0.0
    %53 = vst.msk [vmem:[%s1 + $0xae] sm:$0xff] %vm41, 0.0
    %54 = vst.msk [vmem:[%s1 + $0xc6] sm:$0xff] %vm41, 0.0
    %55 = vst.msk [vmem:[%s1 + $0xce] sm:$0xff] %vm41, 0.0
    %56 = vst.msk [vmem:[%s1 + $0xe6] sm:$0xff] %vm41, 0.0
    %57 = vst.msk [vmem:[%s1 + $0xee] sm:$0xff] %vm41, 0.0
    %vm58 = vcmask 228528
    %59 = vst.msk [vmem:[%s1 + $0x6] sm:$0xff] %vm58, 0.0
    %60 = vst.msk [vmem:[%s1 + $0xe] sm:$0xff] %vm58, 0.0
    %61 = vst.msk [vmem:[%s1 + $0x26] sm:$0xff] %vm58, 0.0
    %62 = vst.msk [vmem:[%s1 + $0x2e] sm:$0xff] %vm58, 0.0
    %63 = vst.msk [vmem:[%s1 + $0x46] sm:$0xff] %vm58, 0.0
    %64 = vst.msk [vmem:[%s1 + $0x4e] sm:$0xff] %vm58, 0.0
    %65 = vst.msk [vmem:[%s1 + $0x66] sm:$0xff] %vm58, 0.0
    %66 = vst.msk [vmem:[%s1 + $0x6e] sm:$0xff] %vm58, 0.0
    %67 = vst.msk [vmem:[%s1 + $0x86] sm:$0xff] %vm58, 0.0
    %68 = vst.msk [vmem:[%s1 + $0x8e] sm:$0xff] %vm58, 0.0
    %69 = vst.msk [vmem:[%s1 + $0xa6] sm:$0xff] %vm58, 0.0
    %70 = vst.msk [vmem:[%s1 + $0xae] sm:$0xff] %vm58, 0.0
    %71 = vst.msk [vmem:[%s1 + $0xc6] sm:$0xff] %vm58, 0.0
    %72 = vst.msk [vmem:[%s1 + $0xce] sm:$0xff] %vm58, 0.0
    %73 = vst.msk [vmem:[%s1 + $0xe6] sm:$0xff] %vm58, 0.0
    %74 = vst.msk [vmem:[%s1 + $0xee] sm:$0xff] %vm58, 0.0
    %v75 = vld [vmem:[#allocation2] sm:$0xff]
    %v76 = vld [vmem:[#allocation2 + $0x8] sm:$0xff]
    %v77 = vld [vmem:[#allocation2 + $0x10] sm:$0xff]
    %v78 = vld [vmem:[#allocation2 + $0x18] sm:$0xff]
    %v79 = vld [vmem:[#allocation2 + $0x20] sm:$0xff]
    %v80 = vld [vmem:[#allocation2 + $0x28] sm:$0xff]
    %v81 = vld [vmem:[#allocation2 + $0x30] sm:$0xff]
    %v82 = vld [vmem:[#allocation2 + $0x38] sm:$0xff]
    %v83 = vld [vmem:[#allocation2 + $0x40] sm:$0xff]
    %v84 = vld [vmem:[#allocation2 + $0x48] sm:$0xff]
    %v85 = vld [vmem:[#allocation2 + $0x50] sm:$0xff]
    %v86 = vld [vmem:[#allocation2 + $0x58] sm:$0xff]
    %v87 = vld [vmem:[#allocation2 + $0x60] sm:$0xff]
    %v88 = vld [vmem:[#allocation2 + $0x68] sm:$0xff]
    %v89 = vld [vmem:[#allocation2 + $0x70] sm:$0xff]
    %v90 = vld [vmem:[#allocation2 + $0x78] sm:$0xff]
    %107 = vrot.lane.b32.xlu0 %v75, 6
    %v108 = vpop.permute.xlu0 %107
    %109 = vrot.lane.b32.xlu0 %v76, 6
    %v110 = vpop.permute.xlu0 %109
    %111 = vrot.lane.b32.xlu0 %v77, 6
    %v112 = vpop.permute.xlu0 %111
    %113 = vrot.lane.b32.xlu0 %v78, 6
    %v114 = vpop.permute.xlu0 %113
    %115 = vrot.lane.b32.xlu0 %v79, 6
    %v116 = vpop.permute.xlu0 %115
    %117 = vrot.lane.b32.xlu0 %v80, 6
    %v118 = vpop.permute.xlu0 %117
    %119 = vrot.lane.b32.xlu0 %v81, 6
    %v120 = vpop.permute.xlu0 %119
    %121 = vrot.lane.b32.xlu0 %v82, 6
    %v122 = vpop.permute.xlu0 %121
    %123 = vrot.lane.b32.xlu0 %v83, 6
    %v124 = vpop.permute.xlu0 %123
    %125 = vrot.lane.b32.xlu0 %v84, 6
    %v126 = vpop.permute.xlu0 %125
    %127 = vrot.lane.b32.xlu0 %v85, 6
    %v128 = vpop.permute.xlu0 %127
    %129 = vrot.lane.b32.xlu0 %v86, 6
    %v130 = vpop.permute.xlu0 %129
    %131 = vrot.lane.b32.xlu0 %v87, 6
    %v132 = vpop.permute.xlu0 %131
    %133 = vrot.lane.b32.xlu0 %v88, 6
    %v134 = vpop.permute.xlu0 %133
    %135 = vrot.lane.b32.xlu0 %v89, 6
    %v136 = vpop.permute.xlu0 %135
    %137 = vrot.lane.b32.xlu0 %v90, 6
    %v138 = vpop.permute.xlu0 %137
    %vm155 = vcmask 179248
    %156 = vst.msk [vmem:[%s1 + $0x6] sm:$0xff] %vm155, %v108
    %157 = vst.msk [vmem:[%s1 + $0xe] sm:$0xff] %vm155, %v110
    %158 = vst.msk [vmem:[%s1 + $0x26] sm:$0xff] %vm155, %v112
    %159 = vst.msk [vmem:[%s1 + $0x2e] sm:$0xff] %vm155, %v114
    %160 = vst.msk [vmem:[%s1 + $0x46] sm:$0xff] %vm155, %v116
    %161 = vst.msk [vmem:[%s1 + $0x4e] sm:$0xff] %vm155, %v118
    %162 = vst.msk [vmem:[%s1 + $0x66] sm:$0xff] %vm155, %v120
    %163 = vst.msk [vmem:[%s1 + $0x6e] sm:$0xff] %vm155, %v122
    %164 = vst.msk [vmem:[%s1 + $0x86] sm:$0xff] %vm155, %v124
    %165 = vst.msk [vmem:[%s1 + $0x8e] sm:$0xff] %vm155, %v126
    %166 = vst.msk [vmem:[%s1 + $0xa6] sm:$0xff] %vm155, %v128
    %167 = vst.msk [vmem:[%s1 + $0xae] sm:$0xff] %vm155, %v130
    %168 = vst.msk [vmem:[%s1 + $0xc6] sm:$0xff] %vm155, %v132
    %169 = vst.msk [vmem:[%s1 + $0xce] sm:$0xff] %vm155, %v134
    %170 = vst.msk [vmem:[%s1 + $0xe6] sm:$0xff] %vm155, %v136
    %171 = vst.msk [vmem:[%s1 + $0xee] sm:$0xff] %vm155, %v138
    // Predicated region
    $region10: #{tpu_custom_call.1} parent=1 // pred_check
      _
    $region11: #{tpu_custom_call.1} parent=1 // pred_check_branch
      %173 = sbr.rel (0) target = $region13
    $region12: #{tpu_custom_call.1} parent=1 // pred_region
      _
    $region13: #{tpu_custom_call.1} parent=1 // pred_fallthru
      _
    // Predicated region
    $region14: #{tpu_custom_call.1} parent=1 // pred_check
      _
    $region15: #{tpu_custom_call.1} parent=1 // pred_check_branch
      %175 = sbr.rel (0) target = $region17
    $region16: #{tpu_custom_call.1} parent=1 // pred_region
      _
    $region17: #{tpu_custom_call.1} parent=1 // pred_fallthru
      _
    %176 = vsyncpa [#allocation3], 1

</llo_original>
